<compile_context>
chip_gen: v7x
topology: tpu7x:2x2x1
jax: 0.10.0
libtpu: 0.0.40
codegen_flags: <defaults>
</compile_context>

<pallas_src>
import jax
import jax.numpy as jnp
from jax.experimental import pallas as pl
from jax.experimental.pallas import tpu as pltpu

LN_EPS = 1e-5


def _calibration_kernel(x_ref, w1_ref, gamma_ref, beta_ref, w2_ref, o_ref):
    # x_ref:     (Bt, out_size)
    # w1_ref:    (out_size, hidden)  -- pre-transposed, stored in MXU dtype
    # gamma_ref: (1, hidden)  f32
    # beta_ref:  (1, hidden)  f32
    # w2_ref:    (hidden, out_size)  -- pre-transposed, stored in MXU dtype
    # o_ref:     (Bt, out_size)

    # Linear1 (no bias): standard (1,0) contraction -> (Bt, hidden).
    # Activation is cast to the weight dtype (bf16 by default); f32 accumulate.
    h = jnp.dot(
        x_ref[...].astype(w1_ref.dtype),
        w1_ref[...],
        preferred_element_type=jnp.float32,
    )

    # LayerNorm over hidden axis (all f32). rsqrt is an EUP op (free slot),
    # row reductions hit the XLU (free slot) -- ld/st is the binding concern.
    mean = jnp.mean(h, axis=-1, keepdims=True)
    centered = h - mean
    var = jnp.mean(centered * centered, axis=-1, keepdims=True)
    scale = jax.lax.rsqrt(var + LN_EPS) * gamma_ref[...]   # gamma folded in
    h = centered * scale + beta_ref[...]

    # ReLU
    h = jnp.maximum(h, 0.0)

    # Linear2 (no bias): narrow the feed to the weight dtype immediately,
    # halving VMEM bytes on the largest intermediate.
    y = jnp.dot(
        h.astype(w2_ref.dtype),
        w2_ref[...],
        preferred_element_type=jnp.float32,
    )

    # TODO(synk): Dropout(0.1) is identity in eval mode; training-mode dropout
    # (PyTorch RNG-matched masking) is not reproduced here.
    o_ref[...] = y.astype(o_ref.dtype)


def prepare_params(w1, gamma, beta, w2, *, mxu_dtype=jnp.bfloat16):
    """One-time parameter preparation (call at init, NOT per forward).

    w1: (hidden, out_size)  -- torch.nn.Linear(out_size, hidden).weight
    w2: (out_size, hidden)  -- torch.nn.Linear(hidden, out_size).weight
    gamma/beta: (hidden,)   -- LayerNorm affine params

    Returns (w1t, gamma2d, beta2d, w2t) with weights pre-transposed to
    matmul layout and cast to `mxu_dtype` (use jnp.float32 for full-f32
    matmuls), and gamma/beta reshaped to (1, hidden) in f32.
    """
    w1t = jnp.asarray(w1, jnp.float32).T.astype(mxu_dtype)       # (out, hidden)
    w2t = jnp.asarray(w2, jnp.float32).T.astype(mxu_dtype)       # (hidden, out)
    gamma2d = jnp.asarray(gamma, jnp.float32).reshape(1, -1)
    beta2d = jnp.asarray(beta, jnp.float32).reshape(1, -1)
    return w1t, gamma2d, beta2d, w2t


def calibration_layer(logits, w1t, gamma, beta, w2t, *, block_b=2048):
    """CalibrationLayer forward (eval mode).

    logits: (B, out_size)           (pass bf16 to halve x/y HBM bytes)
    w1t:    (out_size, hidden)      from prepare_params
    gamma:  (1, hidden)  f32        from prepare_params
    beta:   (1, hidden)  f32        from prepare_params
    w2t:    (hidden, out_size)      from prepare_params
    """
    B, out_size = logits.shape
    hidden = w1t.shape[1]

    io_bytes = jnp.dtype(logits.dtype).itemsize
    w_bytes = jnp.dtype(w1t.dtype).itemsize
    cost = pl.CostEstimate(
        flops=4 * B * out_size * hidden,
        transcendentals=B,                      # one rsqrt per row
        bytes_accessed=int(
            2 * B * out_size * io_bytes         # x in, y out
            + 2 * out_size * hidden * w_bytes   # w1t, w2t
            + 2 * hidden * 4                    # gamma, beta
        ),
    )
    out_shape = jax.ShapeDtypeStruct((B, out_size), logits.dtype)

    num_blocks = pl.cdiv(B, block_b)
    if num_blocks <= 1:
        # Single invocation: no grid, no pipeline scaffolding. Everything
        # lives in VMEM (tens of KiB). This is the right path for single-TC
        # v5e/v6e at any realistic calibration batch.
        vmem_spec = pl.BlockSpec(memory_space=pltpu.MemorySpace.VMEM)
        return pl.pallas_call(
            _calibration_kernel,
            out_shape=out_shape,
            in_specs=[vmem_spec] * 5,
            out_specs=vmem_spec,
            cost_estimate=cost,
        )(logits, w1t, gamma, beta, w2t)

    # Large batch: tile over B (>=2 blocks guaranteed here) so both v7x
    # TensorCores get work and BlockSpec double-buffering hides the x/y DMA.
    # Weights / gamma / beta use constant index_maps and stay VMEM-resident
    # (already in MXU dtype) across grid steps.
    return pl.pallas_call(
        _calibration_kernel,
        out_shape=out_shape,
        grid=(num_blocks,),
        in_specs=[
            pl.BlockSpec((block_b, out_size), lambda i: (i, 0)),
            pl.BlockSpec((out_size, hidden), lambda i: (0, 0)),
            pl.BlockSpec((1, hidden), lambda i: (0, 0)),
            pl.BlockSpec((1, hidden), lambda i: (0, 0)),
            pl.BlockSpec((hidden, out_size), lambda i: (0, 0)),
        ],
        out_specs=pl.BlockSpec((block_b, out_size), lambda i: (i, 0)),
        compiler_params=pltpu.CompilerParams(
            dimension_semantics=("parallel",)
        ),
        cost_estimate=cost,
    )(logits, w1t, gamma, beta, w2t)


def _reference_f32(logits, w1, gamma, beta, w2):
    """Pure f32 reference in PyTorch layout / semantics (eval mode)."""
    h = logits.astype(jnp.float32) @ w1.T
    mean = jnp.mean(h, axis=-1, keepdims=True)
    var = jnp.mean((h - mean) ** 2, axis=-1, keepdims=True)
    h = (h - mean) * jax.lax.rsqrt(var + LN_EPS) * gamma + beta
    h = jnp.maximum(h, 0.0)
    return h @ w2.T


def _reference_prepared(logits, w1t, gamma, beta, w2t):
    """Reference that mirrors the kernel's math on the prepared params."""
    h = jnp.dot(logits.astype(w1t.dtype), w1t, preferred_element_type=jnp.float32)
    mean = jnp.mean(h, axis=-1, keepdims=True)
    centered = h - mean
    var = jnp.mean(centered * centered, axis=-1, keepdims=True)
    h = centered * (jax.lax.rsqrt(var + LN_EPS) * gamma) + beta
    h = jnp.maximum(h, 0.0)
    return jnp.dot(h.astype(w2t.dtype), w2t, preferred_element_type=jnp.float32)


if __name__ == "__main__":
    # Small shapes consistent with the module: batch=8, out_size=32,
    # hidden_size=128 (ctor arg; chosen lane-aligned).
    B, OUT, HIDDEN = 8, 32, 128

    key = jax.random.PRNGKey(0)
    k_x, k_w1, k_w2, k_xl = jax.random.split(key, 4)

    logits = jax.random.normal(k_x, (B, OUT), dtype=jnp.float32)

    # Deterministic parameter init (PyTorch-style uniform bounds for Linear),
    # in PyTorch storage layout; LayerNorm affine at its default init.
    bound1 = 1.0 / (OUT ** 0.5)
    bound2 = 1.0 / (HIDDEN ** 0.5)
    w1 = jax.random.uniform(k_w1, (HIDDEN, OUT), jnp.float32, -bound1, bound1)
    w2 = jax.random.uniform(k_w2, (OUT, HIDDEN), jnp.float32, -bound2, bound2)
    gamma = jnp.ones((HIDDEN,), jnp.float32)
    beta = jnp.zeros((HIDDEN,), jnp.float32)

    # One-time prep: transpose + cast to bf16 MXU feed dtype.
    w1t, g2, b2, w2t = prepare_params(w1, gamma, beta, w2)

    # --- small-batch (no-grid) path ---
    out = calibration_layer(logits, w1t, g2, b2, w2t)
    out = jax.block_until_ready(out)
    assert out.shape == (B, OUT)

    ref_prep = _reference_prepared(logits, w1t, g2, b2, w2t)
    ref_f32 = _reference_f32(logits, w1, gamma, beta, w2)
    assert jnp.allclose(out, ref_prep, atol=2e-3, rtol=2e-3), \
        "mismatch vs bf16-matched reference"
    assert jnp.allclose(out, ref_f32, atol=5e-2, rtol=5e-2), \
        "mismatch vs f32 reference (beyond bf16 operand tolerance)"

    # --- batch-tiled path, including a ragged last block (B % block_b != 0) ---
    BL = 1100
    logits_l = jax.random.normal(k_xl, (BL, OUT), dtype=jnp.float32)
    out_l = calibration_layer(logits_l, w1t, g2, b2, w2t, block_b=256)
    out_l = jax.block_until_ready(out_l)
    assert out_l.shape == (BL, OUT)
    ref_l = _reference_prepared(logits_l, w1t, g2, b2, w2t)
    assert jnp.allclose(out_l, ref_l, atol=2e-3, rtol=2e-3), \
        "tiled/ragged-path mismatch vs bf16-matched reference"

    # --- full-f32 MXU path (precision flag via prepared-param dtype) ---
    w1t_f, g2_f, b2_f, w2t_f = prepare_params(
        w1, gamma, beta, w2, mxu_dtype=jnp.float32)
    out_f = calibration_layer(logits, w1t_f, g2_f, b2_f, w2t_f)
    out_f = jax.block_until_ready(out_f)
    assert jnp.allclose(out_f, ref_f32, atol=1e-2, rtol=1e-2), \
        "f32-path mismatch vs f32 reference"

    print("KERNEL_OK")
</pallas_src>

<mosaic_0001>
module attributes {stable_mosaic.version = 11 : i64} {
  func.func @_calibration_kernel(%arg0: memref<8x32xf32, #tpu.memory_space<vmem>>, %arg1: memref<32x128xbf16, #tpu.memory_space<vmem>>, %arg2: memref<1x128xf32, #tpu.memory_space<vmem>>, %arg3: memref<1x128xf32, #tpu.memory_space<vmem>>, %arg4: memref<128x32xbf16, #tpu.memory_space<vmem>>, %arg5: memref<8x32xf32, #tpu.memory_space<vmem>>) attributes {dimension_semantics = [], scalar_prefetch = 0 : i64, scratch_operands = 0 : i64, tpu.core_type = #tpu.core_type<tc>} {
    %c0 = arith.constant 0 : index
    %c0_0 = arith.constant 0 : index
    %0 = vector.load %arg0[%c0, %c0_0] : memref<8x32xf32, #tpu.memory_space<vmem>>, vector<8x32xf32>
    %1 = arith.truncf %0 : vector<8x32xf32> to vector<8x32xbf16>
    %c0_1 = arith.constant 0 : index
    %c0_2 = arith.constant 0 : index
    %2 = vector.load %arg1[%c0_1, %c0_2] : memref<32x128xbf16, #tpu.memory_space<vmem>>, vector<32x128xbf16>
    %cst = arith.constant dense<0.000000e+00> : vector<8x128xf32>
    %3 = tpu.matmul %1, %2, %cst {dimension_numbers = #tpu.dot_dimension_numbers<[1], [0], [0], [1], [0, 0, 1, 1], [], []>} : vector<8x32xbf16>, vector<32x128xbf16>, vector<8x128xf32> -> vector<8x128xf32>
    %cst_3 = arith.constant dense<0.000000e+00> : vector<8xf32>
    %4 = vector.multi_reduction <add>, %3, %cst_3 [1] : vector<8x128xf32> to vector<8xf32>
    %5 = vector.shape_cast %4 : vector<8xf32> to vector<8x1xf32>
    %cst_4 = arith.constant 1.280000e+02 : f32
    %6 = vector.broadcast %cst_4 : f32 to vector<8x1xf32>
    %7 = arith.divf %5, %6 : vector<8x1xf32>
    %8 = vector.broadcast %7 : vector<8x1xf32> to vector<8x128xf32>
    %9 = arith.subf %3, %8 : vector<8x128xf32>
    %10 = arith.mulf %9, %9 : vector<8x128xf32>
    %cst_5 = arith.constant dense<0.000000e+00> : vector<8xf32>
    %11 = vector.multi_reduction <add>, %10, %cst_5 [1] : vector<8x128xf32> to vector<8xf32>
    %12 = vector.shape_cast %11 : vector<8xf32> to vector<8x1xf32>
    %cst_6 = arith.constant 1.280000e+02 : f32
    %13 = vector.broadcast %cst_6 : f32 to vector<8x1xf32>
    %14 = arith.divf %12, %13 : vector<8x1xf32>
    %cst_7 = arith.constant 9.99999974E-6 : f32
    %15 = vector.broadcast %cst_7 : f32 to vector<8x1xf32>
    %16 = arith.addf %14, %15 : vector<8x1xf32>
    %17 = math.rsqrt %16 : vector<8x1xf32>
    %c0_8 = arith.constant 0 : index
    %c0_9 = arith.constant 0 : index
    %18 = vector.load %arg2[%c0_8, %c0_9] : memref<1x128xf32, #tpu.memory_space<vmem>>, vector<1x128xf32>
    %19 = vector.broadcast %17 : vector<8x1xf32> to vector<8x128xf32>
    %20 = vector.broadcast %18 : vector<1x128xf32> to vector<8x128xf32>
    %21 = arith.mulf %19, %20 : vector<8x128xf32>
    %22 = arith.mulf %9, %21 : vector<8x128xf32>
    %c0_10 = arith.constant 0 : index
    %c0_11 = arith.constant 0 : index
    %23 = vector.load %arg3[%c0_10, %c0_11] : memref<1x128xf32, #tpu.memory_space<vmem>>, vector<1x128xf32>
    %24 = vector.broadcast %23 : vector<1x128xf32> to vector<8x128xf32>
    %25 = arith.addf %22, %24 : vector<8x128xf32>
    %cst_12 = arith.constant 0.000000e+00 : f32
    %26 = vector.broadcast %cst_12 : f32 to vector<8x128xf32>
    %27 = arith.maximumf %25, %26 : vector<8x128xf32>
    %28 = arith.truncf %27 : vector<8x128xf32> to vector<8x128xbf16>
    %c0_13 = arith.constant 0 : index
    %c0_14 = arith.constant 0 : index
    %29 = vector.load %arg4[%c0_13, %c0_14] : memref<128x32xbf16, #tpu.memory_space<vmem>>, vector<128x32xbf16>
    %cst_15 = arith.constant dense<0.000000e+00> : vector<8x32xf32>
    %30 = tpu.matmul %28, %29, %cst_15 {dimension_numbers = #tpu.dot_dimension_numbers<[1], [0], [0], [1], [0, 0, 1, 1], [], []>} : vector<8x128xbf16>, vector<128x32xbf16>, vector<8x32xf32> -> vector<8x32xf32>
    %c0_16 = arith.constant 0 : index
    %c0_17 = arith.constant 0 : index
    %31 = vector.load %arg5[%c0_16, %c0_17] : memref<8x32xf32, #tpu.memory_space<vmem>>, vector<8x32xf32>
    tpu.vector_store %arg5[%c0_16, %c0_17], %30 {strides = array<i32>} : memref<8x32xf32, #tpu.memory_space<vmem>>, vector<8x32xf32>,
    return
  }
}

</mosaic_0001>

<llo_original>
// kernel: tpu_custom_call.1
$region0: #{tpu_custom_call.1}
  #allocation0 [shape = 'u32[]', space=smem, size = 0x4, offset = 0x4, fixed_abs, tag = 'smem constant byte address 0x4 - core index']
  #allocation1 [shape = 'u32[144,128]{1,0:T(1,128)}', space=vmem, size = 0x12000, scoped, tag = 'internal scratch']
  %s0 = inlined_call_operand.vmem [shape: f32[8,32], index: 0, kind: input, shape index: {}]
  %s1 = inlined_call_operand.vmem [shape: bf16[32,128], index: 1, kind: input, shape index: {}]
  %s2 = inlined_call_operand.vmem [shape: f32[1,128], index: 2, kind: input, shape index: {}]
  %s3 = inlined_call_operand.vmem [shape: f32[1,128], index: 3, kind: input, shape index: {}]
  %s4 = inlined_call_operand.vmem [shape: bf16[128,32], index: 4, kind: input, shape index: {}]
  %s5 = inlined_call_operand.hbm [shape: f32[8,32], index: 5, kind: output, shape index: {}]
  %s6 = sld [smem:[#allocation0]]
  $region30: #{tpu_custom_call.1} parent=0
    _
  %s8 = ssub.s32 1, %s6
  %s9 = scalar_select 0, %s8, %s6
  $region1: #{tpu_custom_call.1} parent=0
    #allocation2 [shape = 'u8[4096]{0}', space=vmem, size = 0x1000, scoped, tag = 'output window, operand 0, single buffered']
    #allocation3 [shape = 's32[1]{0}', space=sflag, size = 0x4, scoped, tag = 'scoped memory for tpu_custom_call.1']
    %10 = vsyncpa [#allocation3], 0
    // Predicated region
    $region2: #{tpu_custom_call.1} parent=1 // pred_check
      _
    $region3: #{tpu_custom_call.1} parent=1 // pred_check_branch
      %12 = sbr.rel (0) target = $region5
    $region4: #{tpu_custom_call.1} parent=1 // pred_region
      _
    $region5: #{tpu_custom_call.1} parent=1 // pred_fallthru
      _
    // Predicated region
    $region6: #{tpu_custom_call.1} parent=1 // pred_check
      _
    $region7: #{tpu_custom_call.1} parent=1 // pred_check_branch
      %14 = sbr.rel (0) target = $region9
    $region8: #{tpu_custom_call.1} parent=1 // pred_region
      _
    $region9: #{tpu_custom_call.1} parent=1 // pred_fallthru
      _
    // Predicated region
    $region10: #{tpu_custom_call.1} parent=1 // pred_check
      _
    $region11: #{tpu_custom_call.1} parent=1 // pred_check_branch
      %16 = sbr.rel (0) target = $region13
    $region12: #{tpu_custom_call.1} parent=1 // pred_region
      _
    $region13: #{tpu_custom_call.1} parent=1 // pred_fallthru
      _
    // Predicated region
    $region14: #{tpu_custom_call.1} parent=1 // pred_check
      _
    $region15: #{tpu_custom_call.1} parent=1 // pred_check_branch
      %18 = sbr.rel (0) target = $region17
    $region16: #{tpu_custom_call.1} parent=1 // pred_region
      _
    $region17: #{tpu_custom_call.1} parent=1 // pred_fallthru
      _
    // Predicated region
    $region18: #{tpu_custom_call.1} parent=1 // pred_check
      _
    $region19: #{tpu_custom_call.1} parent=1 // pred_check_branch
      %20 = sbr.rel (0) target = $region21
    $region20: #{tpu_custom_call.1} parent=1 // pred_region
      _
    $region21: #{tpu_custom_call.1} parent=1 // pred_fallthru
      _
    %v22 = vld [vmem:[%s0] sm:$0xff]
    %v23 = vpack.c.bf16 %v22, %v22
    %v24 = vld [vmem:[%s1] sm:$0xf]
    %v25 = vld [vmem:[%s1 + $0x4] sm:$0xf]
    %v26 = vld [vmem:[%s1 + $0x8] sm:$0xf]
    %v27 = vld [vmem:[%s1 + $0xc] sm:$0xf]
    %v32 = vunpack.c.l.b16 %v24
    %v33 = vunpack.c.l.b16 %v25
    %v34 = vunpack.c.l.b16 %v26
    %v35 = vunpack.c.l.b16 %v27
    %v36 = vpack.c.b16 %v33, %v32
    %v37 = vpack.c.b16 %v35, %v34
    %vm40 = vcmask 261120
    %v42 = vsel %vm40, %v23, 0
    %44 = vmatprep.subr.bf16.mxu0 0
    %45 = vmatpush1.bf16.msra.mxu0 %v36
    %46 = vmatprep.subr.bf16.mxu0 0
    %47 = vmatpush1.bf16.msra.mxu0 %v37
    %48 = vmatprep.subr.bf16.mxu0 0
    %49 = vmatpush1.bf16.msra.mxu0 0
    %50 = vmatprep.subr.bf16.mxu0 0
    %51 = vmatpush1.bf16.msra.mxu0 0
    %52 = vmatprep.subr.bf16.mxu0 0
    %53 = vmatpush1.bf16.msra.mxu0 0
    %54 = vmatprep.subr.bf16.mxu0 0
    %55 = vmatpush1.bf16.msra.mxu0 0
    %56 = vmatprep.subr.bf16.mxu0 0
    %57 = vmatpush1.bf16.msra.mxu0 0
    %58 = vmatprep.subr.bf16.mxu0 0
    %59 = vmatpush1.bf16.msra.mxu0 0
    %60 = vmatprep.subr.bf16.mxu0 0
    %61 = vmatpush1.bf16.msra.mxu0 0
    %62 = vmatprep.subr.bf16.mxu0 0
    %63 = vmatpush1.bf16.msra.mxu0 0
    %64 = vmatprep.subr.bf16.mxu0 0
    %65 = vmatpush1.bf16.msra.mxu0 0
    %66 = vmatprep.subr.bf16.mxu0 0
    %67 = vmatpush1.bf16.msra.mxu0 0
    %68 = vmatprep.subr.bf16.mxu0 0
    %69 = vmatpush1.bf16.msra.mxu0 0
    %70 = vmatprep.subr.bf16.mxu0 0
    %71 = vmatpush1.bf16.msra.mxu0 0
    %72 = vmatprep.subr.bf16.mxu0 0
    %73 = vmatpush1.bf16.msra.mxu0 0
    %74 = vmatprep.subr.bf16.mxu0 0
    %75 = vmatpush1.bf16.msra.mxu0 0
    %76 = vmatprep.mubr.bf16.mxu0 0
    %77 = vmatmul.mubr.bf16.gmra.mrb[0].mxu0 %v42
    %v78 = vpop.f32.mrb[0].mxu0
    %v79 = vadd.f32 0.0, %v78
    %v80 = vpop.f32.mrb[0].mxu0
    %v81 = vpop.f32.mrb[0].mxu0
    %v82 = vpop.f32.mrb[0].mxu0
    %83 = vdwg.mxu0
    %84 = vadd.xlane.f32.xlu0 %v79
    %v85 = vpop.xlane.xlu0 %84
    %v86 = vrcp.pop 128.0
    %v87 = vmul.f32 %v85, %v86
    %v88 = vsub.f32 %v79, %v87
    %v89 = vmul.f32 %v88, %v88
    %90 = vadd.xlane.f32.xlu0 %v89
    %v91 = vpop.xlane.xlu0 %90
    %v92 = vmul.f32 %v91, %v86
    %v93 = vadd.f32 %v92, 1e-05
    %v94 = vrsqrt.pop %v93
    %v95 = vld [vmem:[%s2] sm:$0x1]
    %v97 = vlaneseq
    %v98 = vshrl.u32 %v97, 7
    %v99 = vsub.s32 0, %v98
    %v100 = vrot.slane %v95, %v99
    %v102 = vmul.f32 %v94, %v100
    %v103 = vmul.f32 %v88, %v102
    %v104 = vld [vmem:[%s3] sm:$0x1]
    %v106 = vlaneseq
    %v107 = vshrl.u32 %v106, 7
    %v108 = vsub.s32 0, %v107
    %v109 = vrot.slane %v104, %v108
    %v111 = vadd.f32 %v103, %v109
    %v112 = vmax.f32 %v111, 0.0
    %v113 = vpack.c.bf16 %v112, %v112
    %v114 = vld [vmem:[%s4] sm:$0xf]
    %v115 = vld [vmem:[%s4 + $0x4] sm:$0xf]
    %v116 = vld [vmem:[%s4 + $0x8] sm:$0xf]
    %v117 = vld [vmem:[%s4 + $0xc] sm:$0xf]
    %v118 = vld [vmem:[%s4 + $0x10] sm:$0xf]
    %v119 = vld [vmem:[%s4 + $0x14] sm:$0xf]
    %v120 = vld [vmem:[%s4 + $0x18] sm:$0xf]
    %v121 = vld [vmem:[%s4 + $0x1c] sm:$0xf]
    %v122 = vld [vmem:[%s4 + $0x20] sm:$0xf]
    %v123 = vld [vmem:[%s4 + $0x24] sm:$0xf]
    %v124 = vld [vmem:[%s4 + $0x28] sm:$0xf]
    %v125 = vld [vmem:[%s4 + $0x2c] sm:$0xf]
    %v126 = vld [vmem:[%s4 + $0x30] sm:$0xf]
    %v127 = vld [vmem:[%s4 + $0x34] sm:$0xf]
    %v128 = vld [vmem:[%s4 + $0x38] sm:$0xf]
    %v129 = vld [vmem:[%s4 + $0x3c] sm:$0xf]
    %v146 = vunpack.c.l.b16 %v114
    %v147 = vunpack.c.l.b16 %v115
    %v148 = vunpack.c.l.b16 %v116
    %v149 = vunpack.c.l.b16 %v117
    %v150 = vunpack.c.l.b16 %v118
    %v151 = vunpack.c.l.b16 %v119
    %v152 = vunpack.c.l.b16 %v120
    %v153 = vunpack.c.l.b16 %v121
    %v154 = vunpack.c.l.b16 %v122
    %v155 = vunpack.c.l.b16 %v123
    %v156 = vunpack.c.l.b16 %v124
    %v157 = vunpack.c.l.b16 %v125
    %v158 = vunpack.c.l.b16 %v126
    %v159 = vunpack.c.l.b16 %v127
    %v160 = vunpack.c.l.b16 %v128
    %v161 = vunpack.c.l.b16 %v129
    %v162 = vpack.c.b16 %v147, %v146
    %v163 = vpack.c.b16 %v149, %v148
    %v164 = vpack.c.b16 %v151, %v150
    %v165 = vpack.c.b16 %v153, %v152
    %v166 = vpack.c.b16 %v155, %v154
    %v167 = vpack.c.b16 %v157, %v156
    %v168 = vpack.c.b16 %v159, %v158
    %v169 = vpack.c.b16 %v161, %v160
    %178 = vmatprep.subr.bf16.mxu0 0
    %179 = vmatpush1.bf16.msra.mxu0 %v162
    %180 = vmatprep.subr.bf16.mxu0 0
    %181 = vmatpush1.bf16.msra.mxu0 %v163
    %182 = vmatprep.subr.bf16.mxu0 0
    %183 = vmatpush1.bf16.msra.mxu0 %v164
    %184 = vmatprep.subr.bf16.mxu0 0
    %185 = vmatpush1.bf16.msra.mxu0 %v165
    %186 = vmatprep.subr.bf16.mxu0 0
    %187 = vmatpush1.bf16.msra.mxu0 %v166
    %188 = vmatprep.subr.bf16.mxu0 0
    %189 = vmatpush1.bf16.msra.mxu0 %v167
    %190 = vmatprep.subr.bf16.mxu0 0
    %191 = vmatpush1.bf16.msra.mxu0 %v168
    %192 = vmatprep.subr.bf16.mxu0 0
    %193 = vmatpush1.bf16.msra.mxu0 %v169
    %194 = vmatprep.subr.bf16.mxu0 0
    %195 = vmatpush1.bf16.msra.mxu0 0
    %196 = vmatprep.subr.bf16.mxu0 0
    %197 = vmatpush1.bf16.msra.mxu0 0
    %198 = vmatprep.subr.bf16.mxu0 0
    %199 = vmatpush1.bf16.msra.mxu0 0
    %200 = vmatprep.subr.bf16.mxu0 0
    %201 = vmatpush1.bf16.msra.mxu0 0
    %202 = vmatprep.subr.bf16.mxu0 0
    %203 = vmatpush1.bf16.msra.mxu0 0
    %204 = vmatprep.subr.bf16.mxu0 0
    %205 = vmatpush1.bf16.msra.mxu0 0
    %206 = vmatprep.subr.bf16.mxu0 0
    %207 = vmatpush1.bf16.msra.mxu0 0
    %208 = vmatprep.subr.bf16.mxu0 0
    %209 = vmatpush1.bf16.msra.mxu0 0
    %210 = vmatprep.mubr.bf16.mxu0 0
    %211 = vmatmul.mubr.bf16.gmra.mrb[0].mxu0 %v113
    %v212 = vpop.f32.mrb[0].mxu0
    %v213 = vadd.f32 0.0, %v212
    %v214 = vpop.f32.mrb[0].mxu0
    %v215 = vpop.f32.mrb[0].mxu0
    %v216 = vpop.f32.mrb[0].mxu0
    %217 = vdwg.mxu0
    %218 = vst.msk [vmem:[#allocation2] sm:$0xff] %vm40, %v213
    // Predicated region
    $region22: #{tpu_custom_call.1} parent=1 // pred_check
      _
    $region23: #{tpu_custom_call.1} parent=1 // pred_check_branch
      %220 = sbr.rel (0) target = $region25
    $region24: #{tpu_custom_call.1} parent=1 // pred_region
      %s222 = ssub.s32 128, 128
      %223 = vsyncadd [#allocation3], %s222
      %s225 = sshll.u32 [#allocation2], 4
      %s226 = int_to_ptr.vmem [resolvable:$true] %s225
      %228 = dma.vmem_to_hbm [thread:$0]  %s226, 128, %s5, [#allocation3]
    $region25: #{tpu_custom_call.1} parent=1 // pred_fallthru
      _
    // Predicated region
    $region26: #{tpu_custom_call.1} parent=1 // pred_check
      _
    $region27: #{tpu_custom_call.1} parent=1 // pred_check_branch
      %230 = sbr.rel (0) target = $region29
    $region28: #{tpu_custom_call.1} parent=1 // pred_region
      %231 = dma.done [#allocation3], 128
    $region29: #{tpu_custom_call.1} parent=1 // pred_fallthru
      _
    %232 = vsyncpa [#allocation3], 1

</llo_original>
